<compile_context>
chip_gen: v5e
topology: v5e:2x2
jax: 0.10.0
libtpu: 0.0.40
codegen_flags: <defaults>
</compile_context>

<pallas_src>
import functools

import jax
import jax.numpy as jnp
from jax.experimental import pallas as pl
from jax.experimental.pallas import tpu as pltpu


def _round_up(x, m):
    return (x + m - 1) // m * m


def _gap_kernel(x_ref, o_ref, acc_ref, *, inv_hw, tk, hw, lanes):
    """x_ref: (TM, TK) input tile; o_ref: (TM, 1); acc_ref: (TM, lanes) f32 scratch."""
    k = pl.program_id(1)

    @pl.when(k == 0)
    def _init():
        acc_ref[...] = jnp.zeros_like(acc_ref)

    if lanes == 128:
        n = tk // 128
        ragged = (hw % tk) != 0            # static: only the last k tile can overhang
        if ragged:
            limit = hw - k * tk            # first out-of-range column within this tile
            lane = jax.lax.broadcasted_iota(jnp.int32, (x_ref.shape[0], 128), 1)

        def slice_j(j):
            v = x_ref[:, j * 128:(j + 1) * 128].astype(jnp.float32)
            if ragged:
                v = jnp.where(lane + j * 128 < limit, v, 0.0)
            return v

        # Fold TK -> 128 lanes with VPU adds only; two independent chains keep the
        # serial dependency short (cheap, fully hidden under the HBM DMA).
        p0 = slice_j(0)
        p1 = slice_j(1) if n > 1 else None
        for j in range(2, n):
            if j % 2 == 0:
                p0 = p0 + slice_j(j)
            else:
                p1 = p1 + slice_j(j)
        part = p0 if p1 is None else p0 + p1
    else:
        # Single full-width tile whose width is not a multiple of 128 (e.g. 7x7):
        # no masking needed (block == full dim), reduce directly.
        part = jnp.sum(x_ref[...].astype(jnp.float32), axis=-1, keepdims=True)

    acc_ref[...] += part

    @pl.when(k == pl.num_programs(1) - 1)
    def _finalize():
        # One cross-lane (XLU) reduce per NC tile, then scale once and cast/store.
        s = jnp.sum(acc_ref[...], axis=-1, keepdims=True)
        o_ref[...] = (s * inv_hw).astype(o_ref.dtype)


def global_average_pooling(x, *, block_bytes=8 * 1024 * 1024, tm_cap=512):
    """x: (N, C, H, W) -> (N, C, 1, 1), mean over the spatial dims (H, W)."""
    N, C, H, W = x.shape
    nc, hw = N * C, H * W
    x_flat = x.reshape(nc, hw)              # free metadata reshape (NCHW is contiguous)
    itemsize = jnp.dtype(x.dtype).itemsize

    # ---- NC (sublane) tile ---------------------------------------------------
    # Multiple of 8 (or == nc, always legal); aim for >= 2 NC tiles once nc >= 16 so
    # the "parallel" axis can split across v7x's two TensorCores.
    if nc < 16:
        TM = nc
    elif nc <= 2 * tm_cap:
        TM = min(tm_cap, _round_up(pl.cdiv(nc, 2), 8))
    else:
        TM = tm_cap

    # ---- HW (lane / reduction) tile -------------------------------------------
    # Prefer a single full-width tile (one contiguous DMA per NC tile); otherwise a
    # 128-multiple tile sized to ~block_bytes per block.
    tk_budget = block_bytes // (TM * itemsize)
    tk_budget = max(512, min(tk_budget, 8192))
    if hw <= tk_budget:
        TK = hw
        lanes = 128 if hw % 128 == 0 else 1
    else:
        TK = (tk_budget // 128) * 128
        lanes = 128

    # Ragged tails: last HW tile is masked in-kernel; last NC tile is clamped by Pallas
    # (garbage rows only feed output rows that don't exist in the (nc, 1) output).
    grid = (pl.cdiv(nc, TM), pl.cdiv(hw, TK))

    kernel = functools.partial(_gap_kernel, inv_hw=1.0 / float(hw),
                               tk=TK, hw=hw, lanes=lanes)

    out_flat = pl.pallas_call(
        kernel,
        out_shape=jax.ShapeDtypeStruct((nc, 1), x.dtype),
        grid=grid,
        in_specs=[pl.BlockSpec((TM, TK), lambda i, k: (i, k))],
        out_specs=pl.BlockSpec((TM, 1), lambda i, k: (i, 0)),
        scratch_shapes=[pltpu.VMEM((TM, lanes), jnp.float32)],
        compiler_params=pltpu.CompilerParams(
            dimension_semantics=("parallel", "arbitrary"),
            vmem_limit_bytes=32 * 1024 * 1024),
        cost_estimate=pl.CostEstimate(
            flops=nc * hw,
            transcendentals=0,
            bytes_accessed=nc * hw * itemsize + nc * itemsize),
    )(x_flat)

    return out_flat.reshape(N, C, 1, 1)


def _check(x, **kw):
    out = global_average_pooling(x, **kw)
    out = jax.block_until_ready(out)
    ref = jnp.mean(x.astype(jnp.float32), axis=(2, 3), keepdims=True).astype(x.dtype)
    assert out.shape == ref.shape, (out.shape, ref.shape)
    tol = 1e-5 if x.dtype == jnp.float32 else 2e-2
    assert jnp.allclose(out.astype(jnp.float32), ref.astype(jnp.float32),
                        atol=tol, rtol=tol), "mismatch vs reference"


if __name__ == "__main__":
    key = jax.random.PRNGKey(0)
    k0, k1, k2, k3, k4 = jax.random.split(key, 5)

    # Primary spec-consistent small shape (lane-aligned HW, single tile).
    _check(jax.random.normal(k0, (2, 4, 16, 16), dtype=jnp.float32))
    # Non-128-divisible spatial (7x7) -> narrow-lane direct-reduce path.
    _check(jax.random.normal(k1, (2, 3, 7, 7), dtype=jnp.float32))
    # nc not a multiple of the NC tile -> partial (clamped) NC block.
    _check(jax.random.normal(k2, (3, 6, 16, 16), dtype=jnp.float32))
    # Force hw > TK (small block budget) -> multi-step accumulator + ragged HW tail mask.
    _check(jax.random.normal(k3, (1, 8, 56, 56), dtype=jnp.float32),
           block_bytes=64 * 1024)
    # bf16 input: per-tile f32 widening inside the kernel, bf16 HBM traffic.
    _check(jax.random.normal(k4, (2, 4, 16, 16), dtype=jnp.bfloat16))

    print("KERNEL_OK")
</pallas_src>

<mosaic_0001>
module attributes {stable_mosaic.version = 11 : i64} {
  func.func @_gap_kernel(%arg0: i32, %arg1: i32, %arg2: memref<8x256xf32, #tpu.memory_space<vmem>>, %arg3: memref<8x1xf32, #tpu.memory_space<vmem>>, %arg4: memref<8x128xf32, #tpu.memory_space<vmem>>) attributes {dimension_semantics = [#tpu.dimension_semantics<parallel>, #tpu.dimension_semantics<arbitrary>], iteration_bounds = array<i64: 1, 1>, scalar_prefetch = 0 : i64, scratch_operands = 1 : i64, tpu.core_type = #tpu.core_type<tc>, window_params = [{transform_indices = @transform_0, window_bounds = array<i64: 8, 256>}, {transform_indices = @transform_1, window_bounds = array<i64: 8, 1>}]} {
    %c0_i32 = arith.constant 0 : i32
    %0 = arith.cmpi eq, %arg1, %c0_i32 : i32
    %1 = arith.extui %0 : i1 to i32
    %c0_i32_0 = arith.constant 0 : i32
    %2 = arith.cmpi ne, %1, %c0_i32_0 : i32
    scf.if %2 {
      %cst = arith.constant 0.000000e+00 : f32
      %12 = vector.broadcast %cst : f32 to vector<8x128xf32>
      %c0_9 = arith.constant 0 : index
      %c0_10 = arith.constant 0 : index
      %13 = vector.load %arg4[%c0_9, %c0_10] : memref<8x128xf32, #tpu.memory_space<vmem>>, vector<8x128xf32>
      tpu.vector_store %arg4[%c0_9, %c0_10], %12 {strides = array<i32>} : memref<8x128xf32, #tpu.memory_space<vmem>>, vector<8x128xf32>,
    } else {
    }
    %c0 = arith.constant 0 : index
    %c0_1 = arith.constant 0 : index
    %3 = vector.load %arg2[%c0, %c0_1] : memref<8x256xf32, #tpu.memory_space<vmem>>, vector<8x128xf32>
    %c0_2 = arith.constant 0 : index
    %c128 = arith.constant 128 : index
    %4 = vector.load %arg2[%c0_2, %c128] : memref<8x256xf32, #tpu.memory_space<vmem>>, vector<8x128xf32>
    %5 = arith.addf %3, %4 : vector<8x128xf32>
    %c0_3 = arith.constant 0 : index
    %c0_4 = arith.constant 0 : index
    %6 = vector.load %arg4[%c0_3, %c0_4] : memref<8x128xf32, #tpu.memory_space<vmem>>, vector<8x128xf32>
    %7 = arith.addf %6, %5 : vector<8x128xf32>
    %c0_5 = arith.constant 0 : index
    %c0_6 = arith.constant 0 : index
    %8 = vector.load %arg4[%c0_5, %c0_6] : memref<8x128xf32, #tpu.memory_space<vmem>>, vector<8x128xf32>
    tpu.vector_store %arg4[%c0_5, %c0_6], %7 {strides = array<i32>} : memref<8x128xf32, #tpu.memory_space<vmem>>, vector<8x128xf32>,
    %c0_i32_7 = arith.constant 0 : i32
    %9 = arith.cmpi eq, %arg1, %c0_i32_7 : i32
    %10 = arith.extui %9 : i1 to i32
    %c0_i32_8 = arith.constant 0 : i32
    %11 = arith.cmpi ne, %10, %c0_i32_8 : i32
    scf.if %11 {
      %c0_9 = arith.constant 0 : index
      %c0_10 = arith.constant 0 : index
      %12 = vector.load %arg4[%c0_9, %c0_10] : memref<8x128xf32, #tpu.memory_space<vmem>>, vector<8x128xf32>
      %cst = arith.constant dense<0.000000e+00> : vector<8xf32>
      %13 = vector.multi_reduction <add>, %12, %cst [1] : vector<8x128xf32> to vector<8xf32>
      %14 = vector.shape_cast %13 : vector<8xf32> to vector<8x1xf32>
      %cst_11 = arith.constant 3.906250e-03 : f32
      %15 = vector.broadcast %cst_11 : f32 to vector<8x1xf32>
      %16 = arith.mulf %14, %15 : vector<8x1xf32>
      %c0_12 = arith.constant 0 : index
      %c0_13 = arith.constant 0 : index
      %17 = vector.load %arg3[%c0_12, %c0_13] : memref<8x1xf32, #tpu.memory_space<vmem>>, vector<8x1xf32>
      tpu.vector_store %arg3[%c0_12, %c0_13], %16 {strides = array<i32>} : memref<8x1xf32, #tpu.memory_space<vmem>>, vector<8x1xf32>,
    } else {
    }
    return
  }
  func.func @transform_0(%arg0: i32, %arg1: i32) -> (i32, i32) {
    %c0_i32 = arith.constant 0 : i32
    return %arg0, %arg1 : i32, i32
  }
  func.func @transform_1(%arg0: i32, %arg1: i32) -> (i32, i32) {
    %c0_i32 = arith.constant 0 : i32
    %c0_i32_0 = arith.constant 0 : i32
    return %arg0, %c0_i32 : i32, i32
  }
}

</mosaic_0001>

<llo_original>
// kernel: tpu_custom_call.1
$region0: #{tpu_custom_call.1}
  #allocation0 [shape = 'u32[]', space=smem, size = 0x4, offset = 0x4, fixed_abs, tag = 'smem constant byte address 0x4 - core index']
  #allocation1 [shape = 'u32[72,128]{1,0:T(1,128)}', space=vmem, size = 0x9000, scoped, tag = 'internal scratch']
  #allocation2 [shape = 'f32[8,128]{1,0:T(8,128)}', space=vmem, size = 0x1000, scoped, tag = 'scratch operand']
  %s0 = inlined_call_operand.hbm [shape: f32[8,256], index: 0, kind: input, shape index: {}]
  %s1 = inlined_call_operand.vmem [shape: f32[8,1], index: 1, kind: output, shape index: {}]
  %s2 = sld [smem:[#allocation0]]
  $region26: #{tpu_custom_call.1} parent=0
    _
  %s4 = ssub.s32 1, %s2
  %s5 = scalar_select 0, %s4, %s2
  $region1: #{tpu_custom_call.1} parent=0
    #allocation3 [shape = 'u8[8192]{0}', space=vmem, size = 0x2000, scoped, tag = 'input window, operand 0, single buffered']
    #allocation4 [shape = 's32[1]{0}', space=sflag, size = 0x4, scoped, tag = 'scoped memory for tpu_custom_call.1']
    %6 = vsyncpa [#allocation4], 0
    // Predicated region
    $region2: #{tpu_custom_call.1} parent=1 // pred_check
      _
    $region3: #{tpu_custom_call.1} parent=1 // pred_check_branch
      %8 = sbr.rel (0) target = $region5
    $region4: #{tpu_custom_call.1} parent=1 // pred_region
      %10 = vsyncadd [#allocation4], 0
      %s12 = sshll.u32 %s0, 4
      %s13 = int_to_ptr.hbm [resolvable:$true] %s12
      %s14 = sshll.u32 [#allocation3], 4
      %s15 = int_to_ptr.vmem [resolvable:$true] %s14
      %17 = dma.hbm_to_vmem [thread:$0]  %s13, 256, %s15, [#allocation4]
    $region5: #{tpu_custom_call.1} parent=1 // pred_fallthru
      _
    // Predicated region
    $region6: #{tpu_custom_call.1} parent=1 // pred_check
      _
    $region7: #{tpu_custom_call.1} parent=1 // pred_check_branch
      %19 = sbr.rel (0) target = $region9
    $region8: #{tpu_custom_call.1} parent=1 // pred_region
      %21 = dma.done [#allocation4], 256
    $region9: #{tpu_custom_call.1} parent=1 // pred_fallthru
      _
    %p22 = scmp.eq.s32.totalorder 0, 0
    // Predicated region
    $region10: #{tpu_custom_call.1} parent=1 // pred_check
      %p23 = pneg %p22
    $region11: #{tpu_custom_call.1} parent=1 // pred_check_branch
      %25 = sbr.rel (%p23) target = $region13
    $region12: #{tpu_custom_call.1} parent=1 // pred_region
      %26 = vst [vmem:[#allocation2] sm:$0xff] 0.0
    $region13: #{tpu_custom_call.1} parent=1 // pred_fallthru
      _
    %v27 = vld [vmem:[#allocation3] sm:$0xff]
    %v28 = vld [vmem:[#allocation3 + $0x8] sm:$0xff]
    %v29 = vadd.f32 %v27, %v28
    %v30 = vld [vmem:[#allocation2] sm:$0xff]
    %v31 = vadd.f32 %v30, %v29
    %32 = vst [vmem:[#allocation2] sm:$0xff] %v31
    // Predicated region
    $region14: #{tpu_custom_call.1} parent=1 // pred_check
      %p33 = pneg %p22
    $region15: #{tpu_custom_call.1} parent=1 // pred_check_branch
      %35 = sbr.rel (%p33) target = $region17
    $region16: #{tpu_custom_call.1} parent=1 // pred_region
      %v36 = vld [vmem:[#allocation2] sm:$0xff]
      %37 = vadd.xlane.f32.xlu0 %v36
      %v38 = vpop.xlane.xlu0 %37
      %v39 = vmul.f32 %v38, 0.00390625
      %vm40 = vcmask 7168
      %41 = vst.msk [vmem:[%s1] sm:$0xff] %vm40, %v39
    $region17: #{tpu_custom_call.1} parent=1 // pred_fallthru
      _
    // Predicated region
    $region18: #{tpu_custom_call.1} parent=1 // pred_check
      _
    $region19: #{tpu_custom_call.1} parent=1 // pred_check_branch
      %43 = sbr.rel (0) target = $region21
    $region20: #{tpu_custom_call.1} parent=1 // pred_region
      _
    $region21: #{tpu_custom_call.1} parent=1 // pred_fallthru
      _
    // Predicated region
    $region22: #{tpu_custom_call.1} parent=1 // pred_check
      _
    $region23: #{tpu_custom_call.1} parent=1 // pred_check_branch
      %45 = sbr.rel (0) target = $region25
    $region24: #{tpu_custom_call.1} parent=1 // pred_region
      _
    $region25: #{tpu_custom_call.1} parent=1 // pred_fallthru
      _
    %46 = vsyncpa [#allocation4], 1

</llo_original>
